<compile_context>
chip_gen: v5e
topology: v5e:2x2
jax: 0.10.0
libtpu: 0.0.40
codegen_flags: <defaults>
</compile_context>

<pallas_src>
import functools

import jax
import jax.numpy as jnp
from jax.experimental import pallas as pl
from jax.experimental.pallas import tpu as pltpu


# tap order matches PyTorch OIHW weight flattening: t = kh*3 + kw, dh=kh-1, dw=kw-1
_OFFSETS = tuple((dh, dw) for dh in (-1, 0, 1) for dw in (-1, 0, 1))


def _round_up(v, m):
    return ((v + m - 1) // m) * m


def _fsrm_conv_kernel(W, PAD, x_ref, w_ref, conv_ref, sum_ref, sumsq_ref, tap_ref):
    """Pass 1 (per batch item): 3x3 conv -> pre-BN activation + BN partial sums.

    x_ref    : (1, C, HW)        VMEM, source dtype (bf16/f32)
    w_ref    : (9, C)            VMEM, conv weight (tap-major), source dtype
    conv_ref : (1, 1, HW)        VMEM out, f32 pre-BN conv activation
    sum_ref  : (1, 1, 1)         VMEM out, f32 sum(conv) over this block
    sumsq_ref: (1, 1, 1)         VMEM out, f32 sum(conv^2) over this block
    tap_ref  : (9, HW + 2*PAD)   VMEM scratch, zero halo strips of width PAD
    """
    HW = x_ref.shape[2]

    # Zero only the halo strips (tiny: 2*9*PAD f32); done every step so the
    # batch grid axis can be sharded ("parallel") with no cross-step state.
    zero_halo = jnp.zeros((9, PAD), jnp.float32)
    tap_ref[:, pl.ds(0, PAD)] = zero_halo
    tap_ref[:, pl.ds(PAD + HW, PAD)] = zero_halo

    # 3x3 conv, one output channel: the channel reduction is a single MXU
    # matmul in the source dtype with f32 accumulation.
    taps = jnp.dot(w_ref[...], x_ref[0],
                   preferred_element_type=jnp.float32)            # (9, HW) f32
    tap_ref[:, pl.ds(PAD, HW)] = taps                              # PAD % 128 == 0

    # Column-validity masks for the dw = +/-1 taps (row halo is handled by the
    # zero strips, since a +/-1 row shift is a +/-W flat shift).
    col = jax.lax.broadcasted_iota(jnp.int32, (1, HW), 1) % W
    can_left = col > 0            # tap reads column w-1
    can_right = col < (W - 1)     # tap reads column w+1

    acc = jnp.zeros((1, HW), jnp.float32)
    for t, (dh, dw) in enumerate(_OFFSETS):
        s = dh * W + dw
        sl = tap_ref[pl.ds(t, 1), pl.ds(PAD + s, HW)]              # (1, HW)
        if dw == -1:
            sl = jnp.where(can_left, sl, 0.0)
        elif dw == 1:
            sl = jnp.where(can_right, sl, 0.0)
        acc = acc + sl

    conv_ref[0] = acc
    sum_ref[...] = jnp.sum(acc, axis=-1, keepdims=True)[None]           # (1,1,1)
    sumsq_ref[...] = jnp.sum(acc * acc, axis=-1, keepdims=True)[None]   # (1,1,1)


def _fsrm_pool_kernel(x_ref, conv_ref, sb_ref, ccam_ref, fg_ref, bg_ref):
    """Pass 2 (per batch item): ccam = sigmoid(conv*scale + shift); pooled feats.

    x_ref   : (1, C, HW)   VMEM, source dtype
    conv_ref: (1, 1, HW)   VMEM, f32 pre-BN conv activation
    sb_ref  : (2,)         SMEM, f32 [scale, shift] (folded BN affine)
    ccam_ref: (1, 1, HW)   VMEM out, f32
    fg_ref  : (1, 1, C)    VMEM out, f32
    bg_ref  : (1, 1, C)    VMEM out, f32
    """
    C = x_ref.shape[1]
    HW = x_ref.shape[2]
    inv_hw = 1.0 / float(HW)

    scale = sb_ref[0]
    shift = sb_ref[1]
    ccam = jax.nn.sigmoid(conv_ref[0] * scale + shift)             # (1, HW) f32
    ccam_ref[0] = ccam

    # Per-block pooled features; f32 accumulation only for this block.
    xf = x_ref[0].astype(jnp.float32)                              # (C, HW)
    fg = jnp.sum(xf * ccam, axis=-1) * inv_hw                      # (C,)
    xbar = jnp.sum(xf, axis=-1) * inv_hw                           # (C,)
    fg_ref[...] = fg.reshape(1, 1, C)
    bg_ref[...] = (xbar - fg).reshape(1, 1, C)                     # complement identity


def fsrm_forward(x, conv_w, gamma, beta):
    """x: (N, C, H, W) NCHW; conv_w: (1, C, 3, 3) PyTorch OIHW; gamma/beta scalars."""
    N, C, H, W = x.shape
    HW = H * W
    PAD = _round_up(W + 1, 128)          # lane-aligned halo pad (>= W + 1)

    x_flat = x.reshape(N, C, HW)                       # free view of contiguous NCHW
    # (1,C,3,3) -> (C,9) -> (9,C): w_taps[t, c] = conv_w[0, c, t//3, t%3]
    w_taps = jnp.transpose(conv_w.reshape(C, 9), (1, 0)).astype(x.dtype)

    cparams = pltpu.CompilerParams(
        dimension_semantics=("parallel",),
        vmem_limit_bytes=32 * 1024 * 1024)

    # ---- pass 1: conv + BN partial sums, gridded & pipelined over batch ----
    conv, bsum, bsumsq = pl.pallas_call(
        functools.partial(_fsrm_conv_kernel, W, PAD),
        grid=(N,),
        out_shape=(jax.ShapeDtypeStruct((N, 1, HW), jnp.float32),
                   jax.ShapeDtypeStruct((N, 1, 1), jnp.float32),
                   jax.ShapeDtypeStruct((N, 1, 1), jnp.float32)),
        in_specs=[pl.BlockSpec((1, C, HW), lambda n: (n, 0, 0)),
                  pl.BlockSpec((9, C), lambda n: (0, 0))],
        out_specs=(pl.BlockSpec((1, 1, HW), lambda n: (n, 0, 0)),
                   pl.BlockSpec((1, 1, 1), lambda n: (n, 0, 0)),
                   pl.BlockSpec((1, 1, 1), lambda n: (n, 0, 0))),
        scratch_shapes=[pltpu.VMEM((9, HW + 2 * PAD), jnp.float32)],
        compiler_params=cparams,
    )(x_flat, w_taps)

    # ---- tiny BN-stat finalize: batch stats (biased var, eps=1e-5) -> affine ----
    cnt = float(N * HW)
    mean = jnp.sum(bsum) / cnt
    var = jnp.maximum(jnp.sum(bsumsq) / cnt - mean * mean, 0.0)
    inv_std = jax.lax.rsqrt(var + 1e-5)
    scale = jnp.asarray(gamma, jnp.float32) * inv_std
    shift = jnp.asarray(beta, jnp.float32) - mean * scale
    sb = jnp.stack([scale, shift])                                 # (2,) f32

    # ---- pass 2: sigmoid(BN) + pooled fg/bg, gridded & pipelined over batch ----
    ccam_flat, fg, bg = pl.pallas_call(
        _fsrm_pool_kernel,
        grid=(N,),
        out_shape=(jax.ShapeDtypeStruct((N, 1, HW), jnp.float32),
                   jax.ShapeDtypeStruct((N, 1, C), jnp.float32),
                   jax.ShapeDtypeStruct((N, 1, C), jnp.float32)),
        in_specs=[pl.BlockSpec((1, C, HW), lambda n: (n, 0, 0)),
                  pl.BlockSpec((1, 1, HW), lambda n: (n, 0, 0)),
                  pl.BlockSpec(memory_space=pltpu.MemorySpace.SMEM)],
        out_specs=(pl.BlockSpec((1, 1, HW), lambda n: (n, 0, 0)),
                   pl.BlockSpec((1, 1, C), lambda n: (n, 0, 0)),
                   pl.BlockSpec((1, 1, C), lambda n: (n, 0, 0))),
        compiler_params=cparams,
    )(x_flat, conv, sb)

    return (fg.reshape(N, C), bg.reshape(N, C),
            ccam_flat.reshape(N, 1, H, W))


def fsrm_reference(x, conv_w, gamma, beta):
    """Pure-JAX reference mirroring the PyTorch forward (training branch)."""
    N, C, H, W = x.shape
    conv = jax.lax.conv_general_dilated(
        x, conv_w, window_strides=(1, 1), padding="SAME",
        dimension_numbers=("NCHW", "OIHW", "NCHW"))                # (N,1,H,W)
    mean = conv.mean()
    var = ((conv - mean) ** 2).mean()
    bn = (conv - mean) / jnp.sqrt(var + 1e-5) * gamma + beta
    ccam = jax.nn.sigmoid(bn)
    ccam_ = ccam.reshape(N, 1, H * W)
    xr = jnp.transpose(x.reshape(N, C, H * W), (0, 2, 1))          # (N, HW, C)
    fg = (ccam_ @ xr / (H * W)).reshape(N, -1)
    bg = ((1.0 - ccam_) @ xr / (H * W)).reshape(N, -1)
    return fg, bg, ccam


if __name__ == "__main__":
    key = jax.random.PRNGKey(0)
    kx, kw = jax.random.split(key)

    N, C, H, W = 2, 4, 16, 16
    x = jax.random.normal(kx, (N, C, H, W), dtype=jnp.float32)
    conv_w = 0.1 * jax.random.normal(kw, (1, C, 3, 3), dtype=jnp.float32)  # Conv2d(C,1,3)
    gamma, beta = 1.0, 0.0                                                  # BN defaults

    fg, bg, ccam = fsrm_forward(x, conv_w, gamma, beta)
    jax.block_until_ready((fg, bg, ccam))

    fg_r, bg_r, ccam_r = fsrm_reference(x, conv_w, gamma, beta)
    assert jnp.allclose(fg, fg_r, rtol=1e-4, atol=2e-5), "fg mismatch"
    assert jnp.allclose(bg, bg_r, rtol=1e-4, atol=2e-5), "bg mismatch"
    assert jnp.allclose(ccam, ccam_r, rtol=1e-4, atol=2e-5), "ccam mismatch"

    print("KERNEL_OK")
</pallas_src>

<mosaic_0001>
module attributes {stable_mosaic.version = 11 : i64} {
  func.func @_fsrm_conv_kernel(%arg0: i32, %arg1: memref<1x4x256xf32, #tpu.memory_space<vmem>>, %arg2: memref<9x4xf32, #tpu.memory_space<vmem>>, %arg3: memref<1x1x256xf32, #tpu.memory_space<vmem>>, %arg4: memref<1x1x1xf32, #tpu.memory_space<vmem>>, %arg5: memref<1x1x1xf32, #tpu.memory_space<vmem>>, %arg6: memref<9x512xf32, #tpu.memory_space<vmem>>) attributes {dimension_semantics = [#tpu.dimension_semantics<parallel>], iteration_bounds = array<i64: 2>, scalar_prefetch = 0 : i64, scratch_operands = 1 : i64, tpu.core_type = #tpu.core_type<tc>, window_params = [{transform_indices = @transform_0, window_bounds = array<i64: 1, 4, 256>}, {pipeline_mode = #tpu.pipeline_mode<synchronous>, transform_indices = @transform_1, window_bounds = array<i64: 9, 4>}, {transform_indices = @transform_2, window_bounds = array<i64: 1, 1, 256>}, {transform_indices = @transform_3, window_bounds = array<i64: 1, 1, 1>}, {transform_indices = @transform_4, window_bounds = array<i64: 1, 1, 1>}]} {
    %cst = arith.constant 0.000000e+00 : f32
    %0 = vector.broadcast %cst : f32 to vector<9x128xf32>
    %c0 = arith.constant 0 : index
    %c0_0 = arith.constant 0 : index
    %1 = vector.load %arg6[%c0, %c0_0] : memref<9x512xf32, #tpu.memory_space<vmem>>, vector<9x128xf32>
    tpu.vector_store %arg6[%c0, %c0_0], %0 {strides = array<i32>} : memref<9x512xf32, #tpu.memory_space<vmem>>, vector<9x128xf32>,
    %c0_1 = arith.constant 0 : index
    %c384 = arith.constant 384 : index
    %2 = vector.load %arg6[%c0_1, %c384] : memref<9x512xf32, #tpu.memory_space<vmem>>, vector<9x128xf32>
    tpu.vector_store %arg6[%c0_1, %c384], %0 {strides = array<i32>} : memref<9x512xf32, #tpu.memory_space<vmem>>, vector<9x128xf32>,
    %c0_2 = arith.constant 0 : index
    %c0_3 = arith.constant 0 : index
    %3 = vector.load %arg2[%c0_2, %c0_3] : memref<9x4xf32, #tpu.memory_space<vmem>>, vector<9x4xf32>
    %c0_4 = arith.constant 0 : index
    %c0_5 = arith.constant 0 : index
    %c0_6 = arith.constant 0 : index
    %4 = vector.load %arg1[%c0_4, %c0_5, %c0_6] : memref<1x4x256xf32, #tpu.memory_space<vmem>>, vector<1x4x256xf32>
    %5 = vector.shape_cast %4 : vector<1x4x256xf32> to vector<4x256xf32>
    %cst_7 = arith.constant dense<0.000000e+00> : vector<9x256xf32>
    %6 = tpu.matmul %3, %5, %cst_7 {dimension_numbers = #tpu.dot_dimension_numbers<[1], [0], [0], [1], [0, 0, 1, 1], [], []>} : vector<9x4xf32>, vector<4x256xf32>, vector<9x256xf32> -> vector<9x256xf32>
    %c0_8 = arith.constant 0 : index
    %c128 = arith.constant 128 : index
    %7 = vector.load %arg6[%c0_8, %c128] : memref<9x512xf32, #tpu.memory_space<vmem>>, vector<9x256xf32>
    tpu.vector_store %arg6[%c0_8, %c128], %6 {strides = array<i32>} : memref<9x512xf32, #tpu.memory_space<vmem>>, vector<9x256xf32>,
    %8 = tpu.iota {dimensions = array<i32: 1>} : vector<1x256xi32>
    %c16_i32 = arith.constant 16 : i32
    %c0_i32 = arith.constant 0 : i32
    %9 = arith.cmpi eq, %c16_i32, %c0_i32 : i32
    %c1_i32 = arith.constant 1 : i32
    %10 = arith.select %9, %c1_i32, %c16_i32 : i32
    %11 = vector.broadcast %10 : i32 to vector<1x256xi32>
    %12 = arith.remsi %8, %11 : vector<1x256xi32>
    %c0_i32_9 = arith.constant 0 : i32
    %13 = vector.broadcast %c0_i32_9 : i32 to vector<1x256xi32>
    %14 = arith.cmpi ne, %12, %13 : vector<1x256xi32>
    %c0_i32_10 = arith.constant 0 : i32
    %15 = vector.broadcast %c0_i32_10 : i32 to vector<1x256xi32>
    %16 = arith.cmpi slt, %12, %15 : vector<1x256xi32>
    %c0_i32_11 = arith.constant 0 : i32
    %17 = arith.cmpi slt, %10, %c0_i32_11 : i32
    %18 = vector.broadcast %17 : i1 to vector<1x256xi1>
    %19 = vector.broadcast %18 : vector<1x256xi1> to vector<1x256xi1>
    %20 = arith.xori %16, %19 : vector<1x256xi1>
    %21 = arith.andi %20, %14 : vector<1x256xi1>
    %22 = vector.broadcast %10 : i32 to vector<1x256xi32>
    %23 = arith.addi %12, %22 : vector<1x256xi32>
    %24 = arith.select %21, %23, %12 : vector<1x256xi1>, vector<1x256xi32>
    %c0_i32_12 = arith.constant 0 : i32
    %25 = vector.broadcast %c0_i32_12 : i32 to vector<1x256xi32>
    %26 = arith.cmpi sgt, %24, %25 : vector<1x256xi32>
    %c15_i32 = arith.constant 15 : i32
    %27 = vector.broadcast %c15_i32 : i32 to vector<1x256xi32>
    %28 = arith.cmpi slt, %24, %27 : vector<1x256xi32>
    %cst_13 = arith.constant 0.000000e+00 : f32
    %29 = vector.broadcast %cst_13 : f32 to vector<1x256xf32>
    %c0_14 = arith.constant 0 : index
    %c111 = arith.constant 111 : index
    %30 = vector.load %arg6[%c0_14, %c111] : memref<9x512xf32, #tpu.memory_space<vmem>>, vector<1x256xf32>
    %cst_15 = arith.constant 0.000000e+00 : f32
    %31 = vector.broadcast %cst_15 : f32 to vector<1x256xf32>
    %32 = arith.select %26, %30, %31 : vector<1x256xi1>, vector<1x256xf32>
    %33 = arith.addf %29, %32 : vector<1x256xf32>
    %c1 = arith.constant 1 : index
    %c112 = arith.constant 112 : index
    %34 = vector.load %arg6[%c1, %c112] : memref<9x512xf32, #tpu.memory_space<vmem>>, vector<1x256xf32>
    %35 = arith.addf %33, %34 : vector<1x256xf32>
    %c2 = arith.constant 2 : index
    %c113 = arith.constant 113 : index
    %36 = vector.load %arg6[%c2, %c113] : memref<9x512xf32, #tpu.memory_space<vmem>>, vector<1x256xf32>
    %cst_16 = arith.constant 0.000000e+00 : f32
    %37 = vector.broadcast %cst_16 : f32 to vector<1x256xf32>
    %38 = arith.select %28, %36, %37 : vector<1x256xi1>, vector<1x256xf32>
    %39 = arith.addf %35, %38 : vector<1x256xf32>
    %c3 = arith.constant 3 : index
    %c127 = arith.constant 127 : index
    %40 = vector.load %arg6[%c3, %c127] : memref<9x512xf32, #tpu.memory_space<vmem>>, vector<1x256xf32>
    %cst_17 = arith.constant 0.000000e+00 : f32
    %41 = vector.broadcast %cst_17 : f32 to vector<1x256xf32>
    %42 = arith.select %26, %40, %41 : vector<1x256xi1>, vector<1x256xf32>
    %43 = arith.addf %39, %42 : vector<1x256xf32>
    %c4 = arith.constant 4 : index
    %c128_18 = arith.constant 128 : index
    %44 = vector.load %arg6[%c4, %c128_18] : memref<9x512xf32, #tpu.memory_space<vmem>>, vector<1x256xf32>
    %45 = arith.addf %43, %44 : vector<1x256xf32>
    %c5 = arith.constant 5 : index
    %c129 = arith.constant 129 : index
    %46 = vector.load %arg6[%c5, %c129] : memref<9x512xf32, #tpu.memory_space<vmem>>, vector<1x256xf32>
    %cst_19 = arith.constant 0.000000e+00 : f32
    %47 = vector.broadcast %cst_19 : f32 to vector<1x256xf32>
    %48 = arith.select %28, %46, %47 : vector<1x256xi1>, vector<1x256xf32>
    %49 = arith.addf %45, %48 : vector<1x256xf32>
    %c6 = arith.constant 6 : index
    %c143 = arith.constant 143 : index
    %50 = vector.load %arg6[%c6, %c143] : memref<9x512xf32, #tpu.memory_space<vmem>>, vector<1x256xf32>
    %cst_20 = arith.constant 0.000000e+00 : f32
    %51 = vector.broadcast %cst_20 : f32 to vector<1x256xf32>
    %52 = arith.select %26, %50, %51 : vector<1x256xi1>, vector<1x256xf32>
    %53 = arith.addf %49, %52 : vector<1x256xf32>
    %c7 = arith.constant 7 : index
    %c144 = arith.constant 144 : index
    %54 = vector.load %arg6[%c7, %c144] : memref<9x512xf32, #tpu.memory_space<vmem>>, vector<1x256xf32>
    %55 = arith.addf %53, %54 : vector<1x256xf32>
    %c8 = arith.constant 8 : index
    %c145 = arith.constant 145 : index
    %56 = vector.load %arg6[%c8, %c145] : memref<9x512xf32, #tpu.memory_space<vmem>>, vector<1x256xf32>
    %cst_21 = arith.constant 0.000000e+00 : f32
    %57 = vector.broadcast %cst_21 : f32 to vector<1x256xf32>
    %58 = arith.select %28, %56, %57 : vector<1x256xi1>, vector<1x256xf32>
    %59 = arith.addf %55, %58 : vector<1x256xf32>
    %c0_22 = arith.constant 0 : index
    %c0_23 = arith.constant 0 : index
    %c0_24 = arith.constant 0 : index
    %60 = vector.load %arg3[%c0_22, %c0_23, %c0_24] : memref<1x1x256xf32, #tpu.memory_space<vmem>>, vector<1x1x256xf32>
    %61 = vector.shape_cast %60 : vector<1x1x256xf32> to vector<1x256xf32>
    %62 = vector.shape_cast %59 : vector<1x256xf32> to vector<1x1x256xf32>
    tpu.vector_store %arg3[%c0_22, %c0_23, %c0_24], %62 {strides = array<i32>} : memref<1x1x256xf32, #tpu.memory_space<vmem>>, vector<1x1x256xf32>,
    %cst_25 = arith.constant dense<0.000000e+00> : vector<1xf32>
    %63 = vector.multi_reduction <add>, %59, %cst_25 [1] : vector<1x256xf32> to vector<1xf32>
    %64 = vector.shape_cast %63 : vector<1xf32> to vector<1x1xf32>
    %65 = vector.shape_cast %64 : vector<1x1xf32> to vector<1x1x1xf32>
    %c0_26 = arith.constant 0 : index
    %c0_27 = arith.constant 0 : index
    %c0_28 = arith.constant 0 : index
    %66 = vector.load %arg4[%c0_26, %c0_27, %c0_28] : memref<1x1x1xf32, #tpu.memory_space<vmem>>, vector<1x1x1xf32>
    tpu.vector_store %arg4[%c0_26, %c0_27, %c0_28], %65 {strides = array<i32>} : memref<1x1x1xf32, #tpu.memory_space<vmem>>, vector<1x1x1xf32>,
    %67 = arith.mulf %59, %59 : vector<1x256xf32>
    %cst_29 = arith.constant dense<0.000000e+00> : vector<1xf32>
    %68 = vector.multi_reduction <add>, %67, %cst_29 [1] : vector<1x256xf32> to vector<1xf32>
    %69 = vector.shape_cast %68 : vector<1xf32> to vector<1x1xf32>
    %70 = vector.shape_cast %69 : vector<1x1xf32> to vector<1x1x1xf32>
    %c0_30 = arith.constant 0 : index
    %c0_31 = arith.constant 0 : index
    %c0_32 = arith.constant 0 : index
    %71 = vector.load %arg5[%c0_30, %c0_31, %c0_32] : memref<1x1x1xf32, #tpu.memory_space<vmem>>, vector<1x1x1xf32>
    tpu.vector_store %arg5[%c0_30, %c0_31, %c0_32], %70 {strides = array<i32>} : memref<1x1x1xf32, #tpu.memory_space<vmem>>, vector<1x1x1xf32>,
    return
  }
  func.func @transform_0(%arg0: i32) -> (i32, i32, i32) {
    %c0_i32 = arith.constant 0 : i32
    %c0_i32_0 = arith.constant 0 : i32
    %c0_i32_1 = arith.constant 0 : i32
    return %arg0, %c0_i32, %c0_i32_0 : i32, i32, i32
  }
  func.func @transform_1(%arg0: i32) -> (i32, i32) {
    %c0_i32 = arith.constant 0 : i32
    %c0_i32_0 = arith.constant 0 : i32
    %c0_i32_1 = arith.constant 0 : i32
    return %c0_i32, %c0_i32_0 : i32, i32
  }
  func.func @transform_2(%arg0: i32) -> (i32, i32, i32) {
    %c0_i32 = arith.constant 0 : i32
    %c0_i32_0 = arith.constant 0 : i32
    %c0_i32_1 = arith.constant 0 : i32
    return %arg0, %c0_i32, %c0_i32_0 : i32, i32, i32
  }
  func.func @transform_3(%arg0: i32) -> (i32, i32, i32) {
    %c0_i32 = arith.constant 0 : i32
    %c0_i32_0 = arith.constant 0 : i32
    %c0_i32_1 = arith.constant 0 : i32
    return %arg0, %c0_i32, %c0_i32_0 : i32, i32, i32
  }
  func.func @transform_4(%arg0: i32) -> (i32, i32, i32) {
    %c0_i32 = arith.constant 0 : i32
    %c0_i32_0 = arith.constant 0 : i32
    %c0_i32_1 = arith.constant 0 : i32
    return %arg0, %c0_i32, %c0_i32_0 : i32, i32, i32
  }
}

</mosaic_0001>

<llo_original>
// kernel: tpu_custom_call.1
$region0: #{tpu_custom_call.1}
  #allocation0 [shape = 'u32[]', space=smem, size = 0x4, offset = 0x4, fixed_abs, tag = 'smem constant byte address 0x4 - core index']
  #allocation1 [shape = 'u32[72,128]{1,0:T(1,128)}', space=vmem, size = 0x9000, scoped, tag = 'internal scratch']
  #allocation2 [shape = 'f32[9,512]{1,0:T(8,128)}', space=vmem, size = 0x8000, scoped, tag = 'scratch operand']
  %s0 = inlined_call_operand.vmem [shape: f32[2,4,256], index: 0, kind: input, shape index: {}]
  %s1 = inlined_call_operand.vmem [shape: f32[9,4], index: 1, kind: input, shape index: {}]
  %s2 = inlined_call_operand.hbm [shape: f32[2,1,256], index: 2, kind: output, shape index: {0}]
  %s3 = inlined_call_operand.vmem [shape: f32[2,1,1], index: 3, kind: output, shape index: {1}]
  %s4 = inlined_call_operand.vmem [shape: f32[2,1,1], index: 4, kind: output, shape index: {2}]
  %5 = xla_tuple %s2, %s3, %s4
  %s6 = sld [smem:[#allocation0]]
  $region57: #{tpu_custom_call.1} parent=0
    _
  %s8 = ssub.s32 1, %s6
  %s9 = scalar_select 0, %s8, %s6
  $region1: #{tpu_custom_call.1} parent=0
    #allocation3 [shape = 'u8[2048]{0}', space=vmem, size = 0x800, scoped, tag = 'output window, operand 0']
    #allocation4 [shape = 's32[2]{0}', space=sflag, size = 0x8, scoped, tag = 'scoped memory for tpu_custom_call.1']
    %10 = vsyncpa [#allocation4], 0
    %s11 = scalar_lea.sflag [#allocation4], 1
    %12 = vsyncpa %s11, 0
    loop: start=0, step=1, limit=4
    $region2: #{tpu_custom_call.1} parent=1 // loop_pre_header
      _
    $region3: #{tpu_custom_call.1} parent=1 // loop_header
      %s14 = sphi 0, %s18
      %p15 = scmp.ge.s32.totalorder %s14, 4
      %s24 = sphi 0, %s26
      %s27 = sphi 0, %s24
      %s28 = sphi 0, %s27
      %s44 = sphi 0, %s28
      %s48 = sphi 0, %s48
      %s50 = sphi 0, %s48
      %s51 = sphi 0, %s50
      %s65 = sphi 0, %s51
      %s71 = sphi 0, %s73
      %s74 = sphi 0, %s71
      %s75 = sphi 0, %s74
      %s91 = sphi 0, %s75
      %s97 = sphi 0, %s99
      %s100 = sphi 0, %s97
      %s101 = sphi 0, %s100
      %s117 = sphi 0, %s101
      %s123 = sphi 0, %s125
      %s126 = sphi 0, %s123
      %s127 = sphi 0, %s126
      %s143 = sphi 0, %s127
    $region4: #{tpu_custom_call.1} parent=1 // loop_header_branch
      %17 = sbr.rel (%p15) target = $region8
    $region5: #{tpu_custom_call.1} parent=1 // loop_body
      %s19 = ssub.s32 %s14, 1
      %s20 = ssub.s32 %s14, 2
      %s21 = sadd.s32 %s14, 1
      %s22 = ssub.s32 %s14, %s21
      %p23 = scmp.eq.s32.totalorder %s22, 0
      %s25 = sadd.s32 %s24, 1
      %s26 = scalar_select %p23, %s24, %s25
      %p29 = pneg %p23
      %p30 = scmp.eq.s32.totalorder %s14, 1
      %p31 = por %p29, %p30
      %p32 = scmp.ne.s32.totalorder %s24, %s27
      %p33 = scmp.eq.s32.totalorder %s14, 0
      %p34 = por %p32, %p33
      %p35 = scmp.ne.s32.totalorder %s24, %s27
      %p36 = scmp.eq.s32.totalorder %s19, 1
      %p37 = por %p35, %p36
      %p38 = scmp.ne.s32.totalorder %s27, %s28
      %p39 = scmp.eq.s32.totalorder %s19, 0
      %p40 = por %p38, %p39
      %p41 = scmp.ne.s32.totalorder %s27, %s28
      %p42 = scmp.eq.s32.totalorder %s20, 1
      %p43 = por %p41, %p42
      %p45 = scmp.ne.s32.totalorder %s28, %s44
      %p46 = scmp.eq.s32.totalorder %s20, 0
      %p47 = por %p45, %p46
      %s49 = sadd.s32 %s48, 1
      %p52 = scmp.eq.s32.totalorder %s14, 1
      %p53 = scmp.ne.s32.totalorder %s48, %s50
      %p54 = scmp.eq.s32.totalorder %s14, 0
      %p55 = por %p53, %p54
      %p56 = scmp.ne.s32.totalorder %s48, %s50
      %p57 = scmp.eq.s32.totalorder %s19, 1
      %p58 = por %p56, %p57
      %p59 = scmp.ne.s32.totalorder %s50, %s51
      %p60 = scmp.eq.s32.totalorder %s19, 0
      %p61 = por %p59, %p60
      %p62 = scmp.ne.s32.totalorder %s50, %s51
      %p63 = scmp.eq.s32.totalorder %s20, 1
      %p64 = por %p62, %p63
      %p66 = scmp.ne.s32.totalorder %s51, %s65
      %p67 = scmp.eq.s32.totalorder %s20, 0
      %p68 = por %p66, %p67
      %s69 = ssub.s32 %s14, %s21
      %p70 = scmp.eq.s32.totalorder %s69, 0
      %s72 = sadd.s32 %s71, 1
      %s73 = scalar_select %p70, %s71, %s72
      %p76 = pneg %p70
      %p77 = scmp.eq.s32.totalorder %s14, 1
      %p78 = por %p76, %p77
      %p79 = scmp.ne.s32.totalorder %s71, %s74
      %p80 = scmp.eq.s32.totalorder %s14, 0
      %p81 = por %p79, %p80
      %p82 = scmp.ne.s32.totalorder %s71, %s74
      %p83 = scmp.eq.s32.totalorder %s19, 1
      %p84 = por %p82, %p83
      %p85 = scmp.ne.s32.totalorder %s74, %s75
      %p86 = scmp.eq.s32.totalorder %s19, 0
      %p87 = por %p85, %p86
      %p88 = scmp.ne.s32.totalorder %s74, %s75
      %p89 = scmp.eq.s32.totalorder %s20, 1
      %p90 = por %p88, %p89
      %p92 = scmp.ne.s32.totalorder %s75, %s91
      %p93 = scmp.eq.s32.totalorder %s20, 0
      %p94 = por %p92, %p93
      %s95 = ssub.s32 %s14, %s21
      %p96 = scmp.eq.s32.totalorder %s95, 0
      %s98 = sadd.s32 %s97, 1
      %s99 = scalar_select %p96, %s97, %s98
      %p102 = pneg %p96
      %p103 = scmp.eq.s32.totalorder %s14, 1
      %p104 = por %p102, %p103
      %p105 = scmp.ne.s32.totalorder %s97, %s100
      %p106 = scmp.eq.s32.totalorder %s14, 0
      %p107 = por %p105, %p106
      %p108 = scmp.ne.s32.totalorder %s97, %s100
      %p109 = scmp.eq.s32.totalorder %s19, 1
      %p110 = por %p108, %p109
      %p111 = scmp.ne.s32.totalorder %s100, %s101
      %p112 = scmp.eq.s32.totalorder %s19, 0
      %p113 = por %p111, %p112
      %p114 = scmp.ne.s32.totalorder %s100, %s101
      %p115 = scmp.eq.s32.totalorder %s20, 1
      %p116 = por %p114, %p115
      %p118 = scmp.ne.s32.totalorder %s101, %s117
      %p119 = scmp.eq.s32.totalorder %s20, 0
      %p120 = por %p118, %p119
      %s121 = ssub.s32 %s14, %s21
      %p122 = scmp.eq.s32.totalorder %s121, 0
      %s124 = sadd.s32 %s123, 1
      %s125 = scalar_select %p122, %s123, %s124
      %p128 = pneg %p122
      %p129 = scmp.eq.s32.totalorder %s14, 1
      %p130 = por %p128, %p129
      %p131 = scmp.ne.s32.totalorder %s123, %s126
      %p132 = scmp.eq.s32.totalorder %s14, 0
      %p133 = por %p131, %p132
      %p134 = scmp.ne.s32.totalorder %s123, %s126
      %p135 = scmp.eq.s32.totalorder %s19, 1
      %p136 = por %p134, %p135
      %p137 = scmp.ne.s32.totalorder %s126, %s127
      %p138 = scmp.eq.s32.totalorder %s19, 0
      %p139 = por %p137, %p138
      %p140 = scmp.ne.s32.totalorder %s126, %s127
      %p141 = scmp.eq.s32.totalorder %s20, 1
      %p142 = por %p140, %p141
      %p144 = scmp.ne.s32.totalorder %s127, %s143
      %p145 = scmp.eq.s32.totalorder %s20, 0
      %p146 = por %p144, %p145
      %p147 = scmp.le.s32.totalorder 1, %s14
      %p148 = scmp.lt.s32.totalorder %s14, 3
      %p149 = pnand %p147, %p148
      %p150 = pneg %p149
      // Predicated region
      $region9: #{tpu_custom_call.1} parent=5 // pred_check
        _
      $region10: #{tpu_custom_call.1} parent=5 // pred_check_branch
        %152 = sbr.rel (%p149) target = $region12
      $region11: #{tpu_custom_call.1} parent=5 // pred_region
        %s153 = ssub.s32 %s14, 1
        // Predicated region
        $region13: #{tpu_custom_call.1} parent=11 // pred_check
          %p154 = pneg %p61
        $region14: #{tpu_custom_call.1} parent=11 // pred_check_branch
          %156 = sbr.rel (%p154) target = $region16
        $region15: #{tpu_custom_call.1} parent=11 // pred_region
          _
        $region16: #{tpu_custom_call.1} parent=11 // pred_fallthru
          _
      $region12: #{tpu_custom_call.1} parent=5 // pred_fallthru
        _
      %p157 = scmp.lt.s32.totalorder %s14, 2
      // Predicated region
      $region17: #{tpu_custom_call.1} parent=5 // pred_check
        %p158 = pneg %p157
      $region18: #{tpu_custom_call.1} parent=5 // pred_check_branch
        %160 = sbr.rel (%p158) target = $region20
      $region19: #{tpu_custom_call.1} parent=5 // pred_region
        // Predicated region
        $region21: #{tpu_custom_call.1} parent=19 // pred_check
          %p161 = pneg %p34
        $region22: #{tpu_custom_call.1} parent=19 // pred_check_branch
          %163 = sbr.rel (%p161) target = $region24
        $region23: #{tpu_custom_call.1} parent=19 // pred_region
          %p164 = scmp.lt.s32.totalorder %s14, 1
          %s165 = scalar_select %p164, %s14, 1
          %s166 = smul.addr %s165, 2
          %s167 = smul.addr %s166, 4
          %s168 = scalar_lea.vmem %s0, %s167
        $region24: #{tpu_custom_call.1} parent=19 // pred_fallthru
          _
      $region20: #{tpu_custom_call.1} parent=5 // pred_fallthru
        _
      %p169 = scmp.le.s32.totalorder 1, %s14
      %p170 = scmp.lt.s32.totalorder %s14, 3
      %p171 = pnand %p169, %p170
      %p172 = pneg %p171
      // Predicated region
      $region25: #{tpu_custom_call.1} parent=5 // pred_check
        _
      $region26: #{tpu_custom_call.1} parent=5 // pred_check_branch
        %174 = sbr.rel (%p171) target = $region28
      $region27: #{tpu_custom_call.1} parent=5 // pred_region
        %s175 = ssub.s32 %s14, 1
        %p176 = scmp.lt.s32.totalorder %s19, 1
        %s177 = scalar_select %p176, %s19, 1
        %s178 = smul.addr %s177, 2
        %s179 = smul.addr %s178, 4
        %s180 = scalar_lea.vmem %s0, %s179
        %p181 = pneg %p40
        %p182 = pneg %p37
        %p183 = pneg %p61
        %p184 = pneg %p58
        %p185 = pneg %p87
        %p186 = pneg %p84
        %s187 = sand.u32 %s74, 1
        %s188 = scalar_lea.sflag [#allocation4], %s187
        %s189 = sand.u32 %s74, 1
        %s190 = smul.addr %s189, 2
        %s191 = scalar_lea.vmem [#allocation3], %s190
        %p192 = pneg %p113
        %p193 = pneg %p110
        %p194 = scmp.lt.s32.totalorder %s19, 1
        %s195 = scalar_select %p194, %s19, 1
        %s196 = scalar_lea.vmem %s3, %s195
        %p197 = pneg %p139
        %p198 = pneg %p136
        %p199 = scmp.lt.s32.totalorder %s19, 1
        %s200 = scalar_select %p199, %s19, 1
        %s201 = scalar_lea.vmem %s4, %s200
        %p202 = scmp.lt.s32.totalorder %s19, 1
        %s203 = scalar_select %p202, %s19, 1
        %s204 = smul.addr %s203, 2
        %s205 = smul.addr %s204, 4
        %s206 = scalar_lea.vmem %s0, %s205
        %p207 = scmp.lt.s32.totalorder %s19, 1
        %s208 = scalar_select %p207, %s19, 1
        %s209 = scalar_lea.vmem %s3, %s208
        %p210 = scmp.lt.s32.totalorder %s19, 1
        %s211 = scalar_select %p210, %s19, 1
        %s212 = scalar_lea.vmem %s4, %s211
        %213 = vst [vmem:[#allocation2] sm:$0xff] 0.0
        %214 = vst [vmem:[#allocation2 + $0x20] sm:$0x1] 0.0
        %215 = vst [vmem:[#allocation2 + $0x18] sm:$0xff] 0.0
        %216 = vst [vmem:[#allocation2 + $0x38] sm:$0x1] 0.0
        %v217 = vld [vmem:[%s1] sm:$0xff]
        %v218 = vld [vmem:[%s1 + $0x8] sm:$0x1]
        %v219 = vld [vmem:[%s206] sm:$0xff]
        %221 = vst [vmem:[#allocation1] ss:$2 sm:$0xff] %v219
        %v222 = vld.sshfl [vmem:[#allocation1] sm:$0xff pattern:$0x75316420]
        %v223 = vld.sshfl [vmem:[#allocation1 + $0x8] sm:$0xff pattern:$0x75316420]
        %vm224 = vcmask 31744
        %v226 = vsel %vm224, %v217, 0
        %v229 = vsel %vm224, %v218, 0
        %vm231 = vcmask 1043456
        %v232 = vsel %vm231, %v222, 0
        %v234 = vsel %vm231, %v223, 0
        %236 = vmatpush.msra.mxu0 0.0
        %237 = vmatpush.msra.mxu0 0.0
        %238 = vmatpush.msra.mxu0 0.0
        %239 = vmatpush.msra.mxu0 0.0
        %240 = vmatpush.msra.mxu0 0.0
        %241 = vmatpush.msra.mxu0 0.0
        %242 = vmatpush.msra.mxu0 0.0
        %243 = vmatpush.msra.mxu0 0.0
        %244 = vmatpush.msra.mxu0 0.0
        %245 = vmatpush.msra.mxu0 0.0
        %246 = vmatpush.msra.mxu0 0.0
        %247 = vmatpush.msra.mxu0 0.0
        %248 = vmatpush.msra.mxu0 0.0
        %249 = vmatpush.msra.mxu0 0.0
        %250 = vmatpush.msra.mxu0 0.0
        %251 = vmatpush.msra.mxu0 %v232
        %252 = vmatmul.f32.gmra.mxu0 %v226
        %v253 = vpop.f32.mrf.mxu0
        %v254 = vadd.f32 0.0, %v253
        %255 = vmatmul.f32.gmra.mxu0 %v229
        %v256 = vpop.f32.mrf.mxu0
        %v257 = vadd.f32 0.0, %v256
        %258 = vdwg.mxu0
        %259 = vmatpush.msra.mxu0 0.0
        %260 = vmatpush.msra.mxu0 0.0
        %261 = vmatpush.msra.mxu0 0.0
        %262 = vmatpush.msra.mxu0 0.0
        %263 = vmatpush.msra.mxu0 0.0
        %264 = vmatpush.msra.mxu0 0.0
        %265 = vmatpush.msra.mxu0 0.0
        %266 = vmatpush.msra.mxu0 0.0
        %267 = vmatpush.msra.mxu0 0.0
        %268 = vmatpush.msra.mxu0 0.0
        %269 = vmatpush.msra.mxu0 0.0
        %270 = vmatpush.msra.mxu0 0.0
        %271 = vmatpush.msra.mxu0 0.0
        %272 = vmatpush.msra.mxu0 0.0
        %273 = vmatpush.msra.mxu0 0.0
        %274 = vmatpush.msra.mxu0 %v234
        %275 = vmatmul.f32.gmra.mxu0 %v226
        %v276 = vpop.f32.mrf.mxu0
        %v277 = vadd.f32 0.0, %v276
        %278 = vmatmul.f32.gmra.mxu0 %v229
        %v279 = vpop.f32.mrf.mxu0
        %v280 = vadd.f32 0.0, %v279
        %281 = vdwg.mxu0
        %282 = vst [vmem:[#allocation2 + $0x8] sm:$0xff] %v254
        %283 = vst [vmem:[#allocation2 + $0x10] sm:$0xff] %v277
        %284 = vst [vmem:[#allocation2 + $0x28] sm:$0x1] %v257
        %285 = vst [vmem:[#allocation2 + $0x30] sm:$0x1] %v280
        %v286 = vlaneseq
        %v287 = vand.u32 %v286, 127
        %v288 = vadd.s32 %v287, 128
        %vm289 = vcmp.lt.s32.totalorder %v287, 0
        %v290 = vsub.s32 0, %v287
        %v291 = vsel %vm289, %v290, %v287
        %v292 = vshrl.u32 %v291, 4
        %v293 = vand.u32 %v291, 15
        %v294 = vsub.s32 0, %v293
        %v295 = vsel %vm289, %v294, %v293
        %vm296 = vcmp.lt.s32.totalorder %v288, 0
        %v297 = vsub.s32 0, %v288
        %v298 = vsel %vm296, %v297, %v288
        %v299 = vshrl.u32 %v298, 4
        %v300 = vand.u32 %v298, 15
        %v301 = vsub.s32 0, %v300
        %v302 = vsel %vm296, %v301, %v300
        %vm303 = vcmp.ne.s32.totalorder %v295, 0
        %vm304 = vcmp.ne.s32.totalorder %v302, 0
        %vm305 = vcmp.lt.s32.totalorder %v295, 0
        %vm306 = vcmp.lt.s32.totalorder %v302, 0
        %vm307 = vmand %vm305, %vm303
        %vm308 = vmand %vm306, %vm304
        %v309 = vadd.s32 %v295, 16
        %v310 = vadd.s32 %v302, 16
        %v311 = vsel %vm307, %v309, %v295
        %v312 = vsel %vm308, %v310, %v302
        %vm313 = vcmp.gt.s32.totalorder %v311, 0
        %vm314 = vcmp.gt.s32.totalorder %v312, 0
        %vm315 = vcmp.lt.s32.totalorder %v311, 15
        %vm316 = vcmp.lt.s32.totalorder %v312, 15
        %v317 = vld [vmem:[#allocation2] ss:$8 sm:$0x7]
        %v319 = vperm.slane %v317, 0
        %v320 = vperm.slane %v317, 1
        %v321 = vperm.slane %v317, 2
        %322 = vrot.lane.b32.xlu0 %v319, 17
        %v323 = vpop.permute.xlu0 %322
        %324 = vrot.lane.b32.xlu0 %v320, 17
        %v325 = vpop.permute.xlu0 %324
        %326 = vrot.lane.b32.xlu0 %v321, 17
        %v327 = vpop.permute.xlu0 %326
        %vm328 = vcmask 138240
        %v329 = vsel %vm328, %v323, %v325
        %v330 = vsel %vm328, %v325, %v327
        %v333 = vsel %vm313, %v329, 0.0
        %v334 = vsel %vm314, %v330, 0.0
        %v335 = vadd.f32 %v333, 0.0
        %v336 = vadd.f32 %v334, 0.0
        %s337 = scalar_lea.vmem [#allocation2], 1
        %v338 = vld [vmem:[%s337] ss:$8 sm:$0x7]
        %v340 = vperm.slane %v338, 0
        %v341 = vperm.slane %v338, 1
        %v342 = vperm.slane %v338, 2
        %343 = vrot.lane.b32.xlu0 %v340, 16
        %v344 = vpop.permute.xlu0 %343
        %345 = vrot.lane.b32.xlu0 %v341, 16
        %v346 = vpop.permute.xlu0 %345
        %347 = vrot.lane.b32.xlu0 %v342, 16
        %v348 = vpop.permute.xlu0 %347
        %vm349 = vcmask 130048
        %v350 = vsel %vm349, %v344, %v346
        %v351 = vsel %vm349, %v346, %v348
        %v354 = vadd.f32 %v335, %v350
        %v355 = vadd.f32 %v336, %v351
        %s356 = scalar_lea.vmem [#allocation2], 2
        %v357 = vld [vmem:[%s356] ss:$8 sm:$0x7]
        %v359 = vperm.slane %v357, 0
        %v360 = vperm.slane %v357, 1
        %v361 = vperm.slane %v357, 2
        %362 = vrot.lane.b32.xlu0 %v359, 15
        %v363 = vpop.permute.xlu0 %362
        %364 = vrot.lane.b32.xlu0 %v360, 15
        %v365 = vpop.permute.xlu0 %364
        %366 = vrot.lane.b32.xlu0 %v361, 15
        %v367 = vpop.permute.xlu0 %366
        %vm368 = vcmask 121856
        %v369 = vsel %vm368, %v363, %v365
        %v370 = vsel %vm368, %v365, %v367
        %v373 = vsel %vm315, %v369, 0.0
        %v374 = vsel %vm316, %v370, 0.0
        %v375 = vadd.f32 %v354, %v373
        %v376 = vadd.f32 %v355, %v374
        %s377 = scalar_lea.vmem [#allocation2], 3
        %v378 = vld [vmem:[%s377] ss:$8 sm:$0x7]
        %v380 = vperm.slane %v378, 0
        %v381 = vperm.slane %v378, 1
        %v382 = vperm.slane %v378, 2
        %383 = vrot.lane.b32.xlu0 %v380, 1
        %v384 = vpop.permute.xlu0 %383
        %385 = vrot.lane.b32.xlu0 %v381, 1
        %v386 = vpop.permute.xlu0 %385
        %387 = vrot.lane.b32.xlu0 %v382, 1
        %v388 = vpop.permute.xlu0 %387
        %vm389 = vcmask 7168
        %v390 = vsel %vm389, %v384, %v386
        %v391 = vsel %vm389, %v386, %v388
        %v394 = vsel %vm313, %v390, 0.0
        %v395 = vsel %vm314, %v391, 0.0
        %v396 = vadd.f32 %v375, %v394
        %v397 = vadd.f32 %v376, %v395
        %s398 = scalar_lea.vmem [#allocation2], 12
        %v399 = vld [vmem:[%s398] ss:$8 sm:$0x3]
        %v401 = vperm.slane %v399, 0
        %v402 = vperm.slane %v399, 1
        %v405 = vadd.f32 %v396, %v401
        %v406 = vadd.f32 %v397, %v402
        %s407 = scalar_lea.vmem [#allocation2], 13
        %v408 = vld [vmem:[%s407] ss:$8 sm:$0x7]
        %v410 = vperm.slane %v408, 0
        %v411 = vperm.slane %v408, 1
        %v412 = vperm.slane %v408, 2
        %413 = vrot.lane.b32.xlu0 %v410, 127
        %v414 = vpop.permute.xlu0 %413
        %415 = vrot.lane.b32.xlu0 %v411, 127
        %v416 = vpop.permute.xlu0 %415
        %417 = vrot.lane.b32.xlu0 %v412, 127
        %v418 = vpop.permute.xlu0 %417
        %vm419 = vcmask 1039360
        %v420 = vsel %vm419, %v414, %v416
        %v421 = vsel %vm419, %v416, %v418
        %v424 = vsel %vm315, %v420, 0.0
        %v425 = vsel %vm316, %v421, 0.0
        %v426 = vadd.f32 %v405, %v424
        %v427 = vadd.f32 %v406, %v425
        %s428 = scalar_lea.vmem [#allocation2], 14
        %v429 = vld [vmem:[%s428] ss:$8 sm:$0x7]
        %v431 = vperm.slane %v429, 0
        %v432 = vperm.slane %v429, 1
        %v433 = vperm.slane %v429, 2
        %434 = vrot.lane.b32.xlu0 %v431, 113
        %v435 = vpop.permute.xlu0 %434
        %436 = vrot.lane.b32.xlu0 %v432, 113
        %v437 = vpop.permute.xlu0 %436
        %438 = vrot.lane.b32.xlu0 %v433, 113
        %v439 = vpop.permute.xlu0 %438
        %vm440 = vcmask 924672
        %v441 = vsel %vm440, %v435, %v437
        %v442 = vsel %vm440, %v437, %v439
        %v445 = vsel %vm313, %v441, 0.0
        %v446 = vsel %vm314, %v442, 0.0
        %v447 = vadd.f32 %v426, %v445
        %v448 = vadd.f32 %v427, %v446
        %s449 = scalar_lea.vmem [#allocation2], 15
        %v450 = vld [vmem:[%s449] ss:$8 sm:$0x7]
        %v452 = vperm.slane %v450, 0
        %v453 = vperm.slane %v450, 1
        %v454 = vperm.slane %v450, 2
        %455 = vrot.lane.b32.xlu0 %v452, 112
        %v456 = vpop.permute.xlu0 %455
        %457 = vrot.lane.b32.xlu0 %v453, 112
        %v458 = vpop.permute.xlu0 %457
        %459 = vrot.lane.b32.xlu0 %v454, 112
        %v460 = vpop.permute.xlu0 %459
        %vm461 = vcmask 916480
        %v462 = vsel %vm461, %v456, %v458
        %v463 = vsel %vm461, %v458, %v460
        %v466 = vadd.f32 %v447, %v462
        %v467 = vadd.f32 %v448, %v463
        %s468 = scalar_lea.vmem [#allocation2], 40
        %v469 = vld [vmem:[%s468] ss:$8 sm:$0x7]
        %v471 = vperm.slane %v469, 0
        %v472 = vperm.slane %v469, 1
        %v473 = vperm.slane %v469, 2
        %474 = vrot.lane.b32.xlu0 %v471, 111
        %v475 = vpop.permute.xlu0 %474
        %476 = vrot.lane.b32.xlu0 %v472, 111
        %v477 = vpop.permute.xlu0 %476
        %478 = vrot.lane.b32.xlu0 %v473, 111
        %v479 = vpop.permute.xlu0 %478
        %vm480 = vcmask 908288
        %v481 = vsel %vm480, %v475, %v477
        %v482 = vsel %vm480, %v477, %v479
        %v485 = vsel %vm315, %v481, 0.0
        %v486 = vsel %vm316, %v482, 0.0
        %v487 = vadd.f32 %v466, %v485
        %v488 = vadd.f32 %v467, %v486
        %v491 = vrot.slane %v488, 7
        %vm492 = vcmask 1040384
        %v493 = vsel %vm492, %v487, %v491
        %v495 = vlaneseq
        %vm496 = vcmp.ge.s32.totalorder %v495, 0
        %vm497 = vcmp.lt.s32.totalorder %v495, 256
        %vm498 = vmand %vm496, %vm497
        %499 = vst.msk [vmem:[%s191] sm:$0x3] %vm498, %v493
        %v500 = vsel %vm492, %v487, 0.0
        %v501 = vsel %vm492, %v488, 0.0
        %v502 = vadd.f32 %v500, %v501
        %503 = vadd.xlane.f32.xlu0 %v502
        %v504 = vpop.xlane.xlu0 %503
        %vm505 = vcmask 0
        %506 = vst.msk [vmem:[%s209] sm:$0x1] %vm505, %v504
        %v507 = vmul.f32 %v487, %v487
        %v508 = vmul.f32 %v488, %v488
        %v509 = vsel %vm492, %v507, 0.0
        %v510 = vsel %vm492, %v508, 0.0
        %v511 = vadd.f32 %v509, %v510
        %512 = vadd.xlane.f32.xlu0 %v511
        %v513 = vpop.xlane.xlu0 %512
        %514 = vst.msk [vmem:[%s212] sm:$0x1] %vm505, %v513
        %s515 = sand.u32 %s74, 1
        %s516 = scalar_lea.sflag [#allocation4], %s515
        %s517 = sand.u32 %s74, 1
        %s518 = smul.addr %s517, 2
        %s519 = scalar_lea.vmem [#allocation3], %s518
        %p520 = scmp.lt.s32.totalorder %s19, 1
        %s521 = scalar_select %p520, %s19, 1
        %s522 = scalar_lea.vmem %s3, %s521
        %p523 = scmp.lt.s32.totalorder %s19, 1
        %s524 = scalar_select %p523, %s19, 1
        %s525 = scalar_lea.vmem %s4, %s524
        // Predicated region
        $region29: #{tpu_custom_call.1} parent=27 // pred_check
          %p526 = pneg %p84
        $region30: #{tpu_custom_call.1} parent=27 // pred_check_branch
          %528 = sbr.rel (%p526) target = $region32
        $region31: #{tpu_custom_call.1} parent=27 // pred_region
          %530 = vsyncadd %s516, 0
          %s531 = smul.addr %s19, 2
          %s532 = scalar_lea.hbm %s2, %s531
          %s534 = sshll.u32 %s519, 4
          %s535 = int_to_ptr.vmem [resolvable:$true] %s534
          %s536 = sshll.u32 %s532, 4
          %s537 = int_to_ptr.hbm [resolvable:$true] %s536
          %539 = dma.vmem_to_hbm [thread:$0]  %s535, 32, %s537, %s516
        $region32: #{tpu_custom_call.1} parent=27 // pred_fallthru
          _
        // Predicated region
        $region33: #{tpu_custom_call.1} parent=27 // pred_check
          %p540 = pneg %p110
        $region34: #{tpu_custom_call.1} parent=27 // pred_check_branch
          %542 = sbr.rel (%p540) target = $region36
        $region35: #{tpu_custom_call.1} parent=27 // pred_region
          _
        $region36: #{tpu_custom_call.1} parent=27 // pred_fallthru
          _
        // Predicated region
        $region37: #{tpu_custom_call.1} parent=27 // pred_check
          %p543 = pneg %p136
        $region38: #{tpu_custom_call.1} parent=27 // pred_check_branch
          %545 = sbr.rel (%p543) target = $region40
        $region39: #{tpu_custom_call.1} parent=27 // pred_region
          _
        $region40: #{tpu_custom_call.1} parent=27 // pred_fallthru
          _
      $region28: #{tpu_custom_call.1} parent=5 // pred_fallthru
        _
      %p546 = scmp.le.s32.totalorder 2, %s14
      // Predicated region
      $region41: #{tpu_custom_call.1} parent=5 // pred_check
        %p547 = pneg %p546
      $region42: #{tpu_custom_call.1} parent=5 // pred_check_branch
        %549 = sbr.rel (%p547) target = $region44
      $region43: #{tpu_custom_call.1} parent=5 // pred_region
        %s550 = ssub.s32 %s14, 2
        // Predicated region
        $region45: #{tpu_custom_call.1} parent=43 // pred_check
          %p551 = pneg %p90
        $region46: #{tpu_custom_call.1} parent=43 // pred_check_branch
          %553 = sbr.rel (%p551) target = $region48
        $region47: #{tpu_custom_call.1} parent=43 // pred_region
          %s554 = sand.u32 %s75, 1
          %s555 = scalar_lea.sflag [#allocation4], %s554
          %s556 = sand.u32 %s75, 1
          %s557 = smul.addr %s556, 2
          %s558 = scalar_lea.vmem [#allocation3], %s557
          %560 = dma.done %s555, 32
        $region48: #{tpu_custom_call.1} parent=43 // pred_fallthru
          _
        // Predicated region
        $region49: #{tpu_custom_call.1} parent=43 // pred_check
          %p561 = pneg %p116
        $region50: #{tpu_custom_call.1} parent=43 // pred_check_branch
          %563 = sbr.rel (%p561) target = $region52
        $region51: #{tpu_custom_call.1} parent=43 // pred_region
          %p564 = scmp.lt.s32.totalorder %s20, 1
          %s565 = scalar_select %p564, %s20, 1
          %s566 = scalar_lea.vmem %s3, %s565
        $region52: #{tpu_custom_call.1} parent=43 // pred_fallthru
          _
        // Predicated region
        $region53: #{tpu_custom_call.1} parent=43 // pred_check
          %p567 = pneg %p142
        $region54: #{tpu_custom_call.1} parent=43 // pred_check_branch
          %569 = sbr.rel (%p567) target = $region56
        $region55: #{tpu_custom_call.1} parent=43 // pred_region
          %p570 = scmp.lt.s32.totalorder %s20, 1
          %s571 = scalar_select %p570, %s20, 1
          %s572 = scalar_lea.vmem %s4, %s571
        $region56: #{tpu_custom_call.1} parent=43 // pred_fallthru
          _
      $region44: #{tpu_custom_call.1} parent=5 // pred_fallthru
        _
    $region6: #{tpu_custom_call.1} parent=1 // loop_footer
      %s18 = sadd.s32 1, %s14
    $region7: #{tpu_custom_call.1} parent=1 // loop_footer_branch
      %13 = sbr.rel target = $region3
    $region8: #{tpu_custom_call.1} parent=1 // loop_exit
      _
    %573 = vsyncpa [#allocation4], 1
    %s574 = scalar_lea.sflag [#allocation4], 1
    %575 = vsyncpa %s574, 1

</llo_original>
